<compile_context>
chip_gen: v6e
topology: v6e:2x2x1
jax: 0.10.0
libtpu: 0.0.40
codegen_flags: <defaults>
</compile_context>

<pallas_src>
import functools
import math

import jax
import jax.numpy as jnp
from jax.experimental import pallas as pl
from jax.experimental.pallas import tpu as pltpu


_TK_REDUCE = 64     # sublane cap for the reduce kernel (keeps accs in registers, no spill)
_TR_REDUCE = 4096   # lane cap for the reduce kernel (~1 MiB f32 input block)
_TK_NORM = 256      # sublane cap for the elementwise kernel
_TR_NORM = 2048     # lane cap for the elementwise kernel (~2 MiB f32 blocks)


@functools.lru_cache(maxsize=1)
def _vmem_limit():
    """64 MiB on 128-MiB-VMEM parts (v5e/v6e), 32 MiB on v7x-class 64-MiB parts."""
    try:
        info = pltpu.get_tpu_info()
        cap = int(getattr(info, "vmem_capacity_bytes", 0) or 0)
        if cap > 0:
            return int(min(64 * 1024 * 1024, max(16 * 1024 * 1024, cap // 2)))
    except Exception:
        pass
    return 32 * 1024 * 1024


def _sub_align(dtype):
    # packed-sublane count per dtype (f32: 8, bf16: 16, int8/fp8: 32)
    return {4: 8, 2: 16, 1: 32}.get(jnp.dtype(dtype).itemsize, 8)


def _pick_tk(k, align, cap):
    """Sublane tile: aligned when possible, never larger than k or cap."""
    if k <= align:
        return k
    return max(align, min(cap, (k // align) * align))


def _flatten_2d(x):
    """Free reshape into a lane-friendly (rows, cols) view for scalar stats.

    Prefers >=8 rows (sublane utilisation) and at most ~512 rows so the tiny
    per-row partial output stays negligible next to the input, with 128-aligned
    columns when a divisor exists (ragged columns are masked in-kernel)."""
    total = int(x.size)
    best = None
    for r in range(8, 513):
        if total % r:
            continue
        c = total // r
        if c < 128:
            break
        score = (c % 128 == 0, r)        # prefer lane-aligned cols, then more rows
        if best is None or score > best[0]:
            best = (score, (r, c))
    if best is not None:
        return x.reshape(best[1])
    return x.reshape(1, total)           # tiny or awkward totals


# --------------------------------------------------------------------------
# Kernel 1: fused row moments  S1 = sum(x - mu),  S2 = sum((x - mu)^2)
# --------------------------------------------------------------------------
def _row_moments_kernel(mu_ref, x_ref, s1_ref, s2_ref, acc1_ref, acc2_ref, *,
                        lane_chunks, k_total, r_total, tk, tr,
                        mask_rows, mask_cols):
    r = pl.program_id(1)

    @pl.when(r == 0)
    def _init():
        acc1_ref[...] = jnp.zeros_like(acc1_ref)
        acc2_ref[...] = jnp.zeros_like(acc2_ref)

    mu = mu_ref[...].astype(jnp.float32)                       # (tk, 1)

    if mask_rows:
        row_ids = pl.program_id(0) * tk + jax.lax.broadcasted_iota(
            jnp.int32, (tk, 128), 0)
        rmask = row_ids < k_total
    if mask_cols:
        lane_ids = jax.lax.broadcasted_iota(jnp.int32, (tk, 128), 1)
        col_base = r * tr

    acc1 = acc1_ref[...]
    acc2 = acc2_ref[...]
    for j in range(lane_chunks):                               # static unroll
        xj = x_ref[:, j * 128:(j + 1) * 128].astype(jnp.float32)
        d = xj - mu                                            # lane broadcast
        if mask_cols and mask_rows:
            m = rmask & (lane_ids < (r_total - col_base - j * 128))
        elif mask_cols:
            m = lane_ids < (r_total - col_base - j * 128)
        elif mask_rows:
            m = rmask
        if mask_cols or mask_rows:
            d = jnp.where(m, d, 0.0)                           # zero OOB garbage
        acc1 = acc1 + d
        acc2 = acc2 + d * d
    acc1_ref[...] = acc1
    acc2_ref[...] = acc2

    @pl.when(r == pl.num_programs(1) - 1)
    def _finalize():
        # Fold the 128 lanes in-kernel: the HBM partials are only (K, 1).
        s1_ref[...] = jnp.sum(acc1, axis=1, keepdims=True)
        s2_ref[...] = jnp.sum(acc2, axis=1, keepdims=True)


def _row_moments(x2d, mu_rows):
    """Per-row f32 (sum(x - mu), sum((x - mu)^2)) over the last axis of (K, R)."""
    K, R = x2d.shape
    mu_rows = jnp.asarray(mu_rows, jnp.float32).reshape(K, 1)

    if R < 128:
        # TODO(synk): the lane-chunked kernel assumes >=128 reduction columns;
        # tiny / very skinny 2-D views fall back to XLA.
        dlt = x2d.astype(jnp.float32) - mu_rows
        return jnp.sum(dlt, axis=1), jnp.sum(dlt * dlt, axis=1)

    itemsize = jnp.dtype(x2d.dtype).itemsize
    align = _sub_align(x2d.dtype)
    tk = _pick_tk(K, align, _TK_REDUCE)
    # Keep >= 2 steps on the "parallel" K axis when the data allows (v7x megacore).
    if pl.cdiv(K, tk) < 2 and K >= 2 * align:
        tk = max(align, (((K + 1) // 2) // align) * align)
    tr = min(_TR_REDUCE, (R // 128) * 128)
    grid = (pl.cdiv(K, tk), pl.cdiv(R, tr))

    kernel = functools.partial(
        _row_moments_kernel,
        lane_chunks=tr // 128, k_total=K, r_total=R, tk=tk, tr=tr,
        mask_rows=(K % tk) != 0, mask_cols=(R % tr) != 0)

    s1, s2 = pl.pallas_call(
        kernel,
        out_shape=(jax.ShapeDtypeStruct((K, 1), jnp.float32),
                   jax.ShapeDtypeStruct((K, 1), jnp.float32)),
        grid_spec=pltpu.PrefetchScalarGridSpec(
            num_scalar_prefetch=0,
            grid=grid,
            in_specs=[
                pl.BlockSpec((tk, 1), lambda i, r: (i, 0)),
                pl.BlockSpec((tk, tr), lambda i, r: (i, r)),
            ],
            out_specs=[
                pl.BlockSpec((tk, 1), lambda i, r: (i, 0)),
                pl.BlockSpec((tk, 1), lambda i, r: (i, 0)),
            ],
            scratch_shapes=[pltpu.VMEM((tk, 128), jnp.float32),
                            pltpu.VMEM((tk, 128), jnp.float32)],
        ),
        compiler_params=pltpu.CompilerParams(
            dimension_semantics=("parallel", "arbitrary"),
            vmem_limit_bytes=_vmem_limit(),
        ),
        cost_estimate=pl.CostEstimate(
            flops=4 * K * R,
            transcendentals=0,
            bytes_accessed=K * R * itemsize + 3 * K * 4,
        ),
    )(mu_rows, x2d)
    return s1[:, 0], s2[:, 0]


def _fused_moments(x, axes, mean_old):
    """Per-kept-index (sum(x - mean_old), sum((x - mean_old)^2), n) over `axes`."""
    ndim = x.ndim
    axes = tuple(sorted(int(a) % ndim for a in axes))
    kept = tuple(d for d in range(ndim) if d not in axes)
    n = int(math.prod(x.shape[a] for a in axes))
    mean_old = jnp.asarray(mean_old, jnp.float32)

    if not kept:                                           # scalar statistics
        x2d = _flatten_2d(x)
        mu_rows = jnp.broadcast_to(mean_old.reshape(()), (x2d.shape[0], 1))
        s1, s2 = _row_moments(x2d, mu_rows)
        return jnp.sum(s1), jnp.sum(s2), n

    # trailing run of reduced axes
    t = 0
    for dpos in range(ndim - 1, -1, -1):
        if dpos in axes:
            t += 1
        else:
            break
    kept_shape = tuple(x.shape[d] for d in kept)

    if t == 0:
        # Last axis is kept: one kept-first transpose pass, then row reduce.
        # TODO(synk): a sublane-axis reduction kernel variant would avoid this
        # extra HBM pass when no reduced axis is trailing.
        perm = kept + axes
        rows = math.prod(kept_shape)
        x2d = jnp.transpose(x, perm).reshape(rows, n)
        mu_k = jnp.transpose(mean_old, perm) if mean_old.ndim == ndim else mean_old
        mu_rows = jnp.broadcast_to(
            mu_k, kept_shape + (1,) * len(axes)).reshape(rows, 1)
        s1, s2 = _row_moments(x2d, mu_rows)
        return s1.reshape(kept_shape), s2.reshape(kept_shape), n

    # Fast path: trailing reduced axes merge freely (no transpose); any reduced
    # prefix axes are finished on the tiny per-row partials.
    prefix_shape = x.shape[:ndim - t]
    rows = math.prod(prefix_shape) if prefix_shape else 1
    cols = math.prod(x.shape[ndim - t:])
    x2d = x.reshape(rows, cols)
    mu_rows = jnp.broadcast_to(
        mean_old, prefix_shape + (1,) * t).reshape(rows, 1)
    s1, s2 = _row_moments(x2d, mu_rows)
    s1 = s1.reshape(prefix_shape)
    s2 = s2.reshape(prefix_shape)
    red_prefix = tuple(a for a in axes if a < ndim - t)
    if red_prefix:
        s1 = jnp.sum(s1, axis=red_prefix)
        s2 = jnp.sum(s2, axis=red_prefix)
    return s1.reshape(kept_shape), s2.reshape(kept_shape), n


# --------------------------------------------------------------------------
# Kernel 2: tiled elementwise normalization (v - mean) * disc
# --------------------------------------------------------------------------
def _znorm_kernel(x_ref, m_ref, d_ref, o_ref):
    x = x_ref[...].astype(jnp.float32)
    o_ref[...] = ((x - m_ref[...]) * d_ref[...]).astype(o_ref.dtype)


def _znorm_2d(x2d, m_rows, d_rows):
    K, R = x2d.shape
    itemsize = jnp.dtype(x2d.dtype).itemsize
    align = _sub_align(x2d.dtype)
    tk = _pick_tk(K, align, _TK_NORM)
    tr = R if R < 128 else min(_TR_NORM, (R // 128) * 128)
    # Keep >= 2 steps on a parallel axis when possible (v7x megacore).
    if pl.cdiv(K, tk) * pl.cdiv(R, tr) < 2:
        if R >= 256:
            tr = max(128, (((R + 1) // 2) // 128) * 128)
        elif K >= 2 * align:
            tk = max(align, (((K + 1) // 2) // align) * align)
    grid = (pl.cdiv(K, tk), pl.cdiv(R, tr))

    return pl.pallas_call(
        _znorm_kernel,
        out_shape=jax.ShapeDtypeStruct((K, R), x2d.dtype),
        grid_spec=pltpu.PrefetchScalarGridSpec(
            num_scalar_prefetch=0,
            grid=grid,
            in_specs=[
                pl.BlockSpec((tk, tr), lambda i, j: (i, j)),
                pl.BlockSpec((tk, 1), lambda i, j: (i, 0)),
                pl.BlockSpec((tk, 1), lambda i, j: (i, 0)),
            ],
            out_specs=pl.BlockSpec((tk, tr), lambda i, j: (i, j)),
        ),
        compiler_params=pltpu.CompilerParams(
            dimension_semantics=("parallel", "parallel"),
            vmem_limit_bytes=_vmem_limit(),
        ),
        cost_estimate=pl.CostEstimate(
            flops=2 * K * R,
            transcendentals=0,
            bytes_accessed=2 * K * R * itemsize + 2 * K * 4,
        ),
    )(x2d, m_rows, d_rows)


def _apply_znorm(v, mean, disc):
    """(v - mean) * disc with mean/disc of the module's parameter shape."""
    mean = jnp.asarray(mean, jnp.float32)
    disc = jnp.asarray(disc, jnp.float32)

    if mean.ndim == 0:                                     # scalar statistics
        v2d = _flatten_2d(v)
        rows = v2d.shape[0]
        m_rows = jnp.broadcast_to(mean, (rows, 1))
        d_rows = jnp.broadcast_to(disc, (rows, 1))
        return _znorm_2d(v2d, m_rows, d_rows).reshape(v.shape)

    if mean.ndim != v.ndim:
        # TODO(synk): unusual statistic rank; XLA elementwise fallback.
        return ((v - mean) * disc).astype(v.dtype)

    # trailing run of broadcast (size-1) stat dims -> per-row statistics
    t = 0
    for dpos in range(v.ndim - 1, -1, -1):
        if mean.shape[dpos] == 1:
            t += 1
        else:
            break
    if t == 0:
        # TODO(synk): statistics vary along the last axis; would need a
        # column-broadcast kernel variant, fall back to XLA elementwise.
        return ((v - mean) * disc).astype(v.dtype)

    prefix_shape = v.shape[:v.ndim - t]
    rows = math.prod(prefix_shape) if prefix_shape else 1
    cols = math.prod(v.shape[v.ndim - t:])
    v2d = v.reshape(rows, cols)
    m_rows = jnp.broadcast_to(mean, prefix_shape + (1,) * t).reshape(rows, 1)
    d_rows = jnp.broadcast_to(disc, prefix_shape + (1,) * t).reshape(rows, 1)
    return _znorm_2d(v2d, m_rows, d_rows).reshape(v.shape)


_apply_eval = jax.jit(_apply_znorm)


# --------------------------------------------------------------------------
# Whole training step under one jit (ratio is a traced device scalar)
# --------------------------------------------------------------------------
@functools.partial(jax.jit, static_argnames=("axes", "output_shape", "eps"))
def _train_step(v, v_stats, mean, std, ratio, *, axes, output_shape, eps):
    mean = jnp.asarray(mean, jnp.float32)
    std = jnp.asarray(std, jnp.float32)

    if output_shape == 1:
        red_axes = tuple(range(v_stats.ndim))
    else:
        red_axes = axes
    s1, s2, n = _fused_moments(v_stats, red_axes, mean)
    if output_shape != 1:
        s1 = jnp.reshape(s1, output_shape)
        s2 = jnp.reshape(s2, output_shape)

    inv_n = 1.0 / float(n)
    batch_mean = mean + s1 * inv_n                         # exact: shift by old mean
    new_mean = (1.0 - ratio) * mean + ratio * batch_mean
    d = new_mean - mean
    # Exact shift identity: sum((x-new_mean)^2) = S2 - 2*d*S1 + n*d^2
    ssq = s2 - 2.0 * d * s1 + float(n) * (d * d)
    new_std = (1.0 - ratio) * std + ratio * (ssq * inv_n)
    disc = 1.0 / (eps + jnp.sqrt(new_std))
    out = _apply_znorm(v, new_mean, disc)
    return out, new_mean, new_std, disc


# --------------------------------------------------------------------------
# Module wrapper
# --------------------------------------------------------------------------
class ZNormalizer:
    """JAX/Pallas port of diautils' ZNormalizer forward pass."""

    def __init__(self, input_shape=None, axis=None, beta=1e-6, epsilon=1e-12):
        self.input_shape = input_shape
        self.axis = axis
        if (input_shape is not None
                and isinstance(input_shape, (tuple, list))
                and len(input_shape) > 1
                and axis is not None
                and (not isinstance(axis, (tuple, list))
                     or len(axis) < len(input_shape))):
            if isinstance(axis, (tuple, list)):
                self.output_shape = tuple(1 if i in axis else s
                                          for i, s in enumerate(input_shape))
            else:
                self.output_shape = tuple(1 if i == axis else s
                                          for i, s in enumerate(input_shape))
            self.output_shape = tuple(-1 if s is None else s for s in self.output_shape)
            self.param_shape = tuple(1 if s is None or s == -1 else s
                                     for s in self.output_shape)
        else:
            self.output_shape = 1
            self.param_shape = 1
        self.beta = float(beta)
        self.epsilon = float(epsilon)
        if self.param_shape == 1:
            self.mean = jnp.asarray(0.0, jnp.float32)
            self.std = jnp.asarray(1.0, jnp.float32)
        else:
            self.mean = jnp.zeros(self.param_shape, jnp.float32)
            self.std = jnp.ones(self.param_shape, jnp.float32)
        # TODO(synk): beta_power stays a host-side double (mirrors the torch
        # double buffer for precision); ratio enters the jitted step as a
        # traced device scalar so no per-step recompiles happen.
        self.beta_power = 1.0
        self.disc = None
        self.training = True

    def train(self):
        self.training = True
        return self

    def eval(self):
        self.training = False
        return self

    def __call__(self, v, idx=None):
        return self.forward(v, idx)

    def forward(self, v, idx=None):
        if self.training:
            self.beta_power *= 1.0 - self.beta
            ratio = jnp.asarray(
                self.beta / max(1.0 - self.beta_power, self.beta), jnp.float32)
            v_stats = v if idx is None else v[idx]
            if self.output_shape == 1:
                axes = None
                oshape = 1
            else:
                axes = self.axis if isinstance(self.axis, (tuple, list)) else (self.axis,)
                axes = tuple(int(a) for a in axes)
                oshape = tuple(self.output_shape)
            out, self.mean, self.std, self.disc = _train_step(
                v, v_stats, self.mean, self.std, ratio,
                axes=axes, output_shape=oshape, eps=self.epsilon)
            # TODO(synk): BackPropControlFunction / siglog only shapes the
            # backward pass (forward is identity), so it is omitted here.
            return out
        if self.disc is None:
            self.disc = 1.0 / (self.epsilon + jnp.sqrt(self.std))
        return _apply_eval(v, self.mean, self.disc)


# --------------------------------------------------------------------------
# Pure-jnp reference of one training step (mirrors the PyTorch math)
# --------------------------------------------------------------------------
def _ref_train_step(v, mean0, std0, beta_power0, beta, eps, axis, output_shape):
    beta_power = beta_power0 * (1.0 - beta)
    ratio = jnp.asarray(beta / max(1.0 - beta_power, beta), jnp.float32)
    if output_shape == 1:
        new_mean = (1.0 - ratio) * mean0 + ratio * jnp.mean(v)
        new_std = (1.0 - ratio) * std0 + ratio * jnp.mean((v - new_mean) ** 2)
    else:
        new_mean = (1.0 - ratio) * mean0 + ratio * jnp.mean(v, axis=axis).reshape(output_shape)
        new_std = (1.0 - ratio) * std0 + ratio * jnp.mean(
            (v - new_mean) ** 2, axis=axis).reshape(output_shape)
    disc = 1.0 / (eps + jnp.sqrt(new_std))
    return (v - new_mean) * disc, new_mean, new_std


if __name__ == "__main__":
    key = jax.random.PRNGKey(0)
    x = jax.random.normal(key, (2, 4, 16, 16), dtype=jnp.float32) * 2.0 + 0.5

    # Per-channel statistics: mean/std over batch + spatial axes (NCHW).
    zn = ZNormalizer(input_shape=(None, 4, 16, 16), axis=(0, 2, 3))
    y = zn(x)
    jax.block_until_ready(y)
    y_ref, m_ref, s_ref = _ref_train_step(
        x, jnp.zeros((1, 4, 1, 1), jnp.float32), jnp.ones((1, 4, 1, 1), jnp.float32),
        1.0, zn.beta, zn.epsilon, (0, 2, 3), (1, 4, 1, 1))
    assert y.shape == x.shape, y.shape
    assert jnp.allclose(y, y_ref, atol=3e-5, rtol=3e-5)
    assert jnp.allclose(zn.mean, m_ref, atol=3e-5, rtol=3e-5)
    assert jnp.allclose(zn.std, s_ref, atol=3e-5, rtol=3e-5)

    # Eval mode reuses the running statistics (elementwise kernel only).
    y_eval = zn.eval()(x)
    jax.block_until_ready(y_eval)
    assert jnp.allclose(y_eval, (x - zn.mean) * zn.disc, atol=3e-5, rtol=3e-5)

    # Scalar statistics (no input_shape/axis).
    zn2 = ZNormalizer()
    y2 = zn2(x)
    jax.block_until_ready(y2)
    y2_ref, m2_ref, s2_ref = _ref_train_step(
        x, jnp.asarray(0.0, jnp.float32), jnp.asarray(1.0, jnp.float32),
        1.0, zn2.beta, zn2.epsilon, None, 1)
    assert y2.shape == x.shape, y2.shape
    assert jnp.allclose(y2, y2_ref, atol=3e-5, rtol=3e-5)
    assert jnp.allclose(zn2.mean, m2_ref, atol=3e-5, rtol=3e-5)
    assert jnp.allclose(zn2.std, s2_ref, atol=3e-5, rtol=3e-5)

    print("KERNEL_OK")
</pallas_src>

<mosaic_0001>
module attributes {stable_mosaic.version = 11 : i64} {
  func.func @_row_moments_kernel(%arg0: i32, %arg1: i32, %arg2: memref<8x1xf32, #tpu.memory_space<vmem>>, %arg3: memref<8x256xf32, #tpu.memory_space<vmem>>, %arg4: memref<8x1xf32, #tpu.memory_space<vmem>>, %arg5: memref<8x1xf32, #tpu.memory_space<vmem>>, %arg6: memref<8x128xf32, #tpu.memory_space<vmem>>, %arg7: memref<8x128xf32, #tpu.memory_space<vmem>>) attributes {dimension_semantics = [#tpu.dimension_semantics<parallel>, #tpu.dimension_semantics<arbitrary>], iteration_bounds = array<i64: 1, 1>, scalar_prefetch = 0 : i64, scratch_operands = 2 : i64, tpu.core_type = #tpu.core_type<tc>, window_params = [{transform_indices = @transform_0, window_bounds = array<i64: 8, 1>}, {transform_indices = @transform_1, window_bounds = array<i64: 8, 256>}, {transform_indices = @transform_2, window_bounds = array<i64: 8, 1>}, {transform_indices = @transform_3, window_bounds = array<i64: 8, 1>}]} {
    %c0_i32 = arith.constant 0 : i32
    %0 = arith.cmpi eq, %arg1, %c0_i32 : i32
    %1 = arith.extui %0 : i1 to i32
    %c0_i32_0 = arith.constant 0 : i32
    %2 = arith.cmpi ne, %1, %c0_i32_0 : i32
    scf.if %2 {
      %cst = arith.constant 0.000000e+00 : f32
      %23 = vector.broadcast %cst : f32 to vector<8x128xf32>
      %c0_15 = arith.constant 0 : index
      %c0_16 = arith.constant 0 : index
      %24 = vector.load %arg6[%c0_15, %c0_16] : memref<8x128xf32, #tpu.memory_space<vmem>>, vector<8x128xf32>
      tpu.vector_store %arg6[%c0_15, %c0_16], %23 {strides = array<i32>} : memref<8x128xf32, #tpu.memory_space<vmem>>, vector<8x128xf32>,
      %cst_17 = arith.constant 0.000000e+00 : f32
      %25 = vector.broadcast %cst_17 : f32 to vector<8x128xf32>
      %c0_18 = arith.constant 0 : index
      %c0_19 = arith.constant 0 : index
      %26 = vector.load %arg7[%c0_18, %c0_19] : memref<8x128xf32, #tpu.memory_space<vmem>>, vector<8x128xf32>
      tpu.vector_store %arg7[%c0_18, %c0_19], %25 {strides = array<i32>} : memref<8x128xf32, #tpu.memory_space<vmem>>, vector<8x128xf32>,
    } else {
    }
    %c0 = arith.constant 0 : index
    %c0_1 = arith.constant 0 : index
    %3 = vector.load %arg2[%c0, %c0_1] : memref<8x1xf32, #tpu.memory_space<vmem>>, vector<8x1xf32>
    %c0_2 = arith.constant 0 : index
    %c0_3 = arith.constant 0 : index
    %4 = vector.load %arg6[%c0_2, %c0_3] : memref<8x128xf32, #tpu.memory_space<vmem>>, vector<8x128xf32>
    %c0_4 = arith.constant 0 : index
    %c0_5 = arith.constant 0 : index
    %5 = vector.load %arg7[%c0_4, %c0_5] : memref<8x128xf32, #tpu.memory_space<vmem>>, vector<8x128xf32>
    %c0_6 = arith.constant 0 : index
    %c0_7 = arith.constant 0 : index
    %6 = vector.load %arg3[%c0_6, %c0_7] : memref<8x256xf32, #tpu.memory_space<vmem>>, vector<8x128xf32>
    %7 = vector.broadcast %3 : vector<8x1xf32> to vector<8x128xf32>
    %8 = arith.subf %6, %7 : vector<8x128xf32>
    %9 = arith.addf %4, %8 : vector<8x128xf32>
    %10 = arith.mulf %8, %8 : vector<8x128xf32>
    %11 = arith.addf %5, %10 : vector<8x128xf32>
    %c0_8 = arith.constant 0 : index
    %c128 = arith.constant 128 : index
    %12 = vector.load %arg3[%c0_8, %c128] : memref<8x256xf32, #tpu.memory_space<vmem>>, vector<8x128xf32>
    %13 = vector.broadcast %3 : vector<8x1xf32> to vector<8x128xf32>
    %14 = arith.subf %12, %13 : vector<8x128xf32>
    %15 = arith.addf %9, %14 : vector<8x128xf32>
    %16 = arith.mulf %14, %14 : vector<8x128xf32>
    %17 = arith.addf %11, %16 : vector<8x128xf32>
    %c0_9 = arith.constant 0 : index
    %c0_10 = arith.constant 0 : index
    %18 = vector.load %arg6[%c0_9, %c0_10] : memref<8x128xf32, #tpu.memory_space<vmem>>, vector<8x128xf32>
    tpu.vector_store %arg6[%c0_9, %c0_10], %15 {strides = array<i32>} : memref<8x128xf32, #tpu.memory_space<vmem>>, vector<8x128xf32>,
    %c0_11 = arith.constant 0 : index
    %c0_12 = arith.constant 0 : index
    %19 = vector.load %arg7[%c0_11, %c0_12] : memref<8x128xf32, #tpu.memory_space<vmem>>, vector<8x128xf32>
    tpu.vector_store %arg7[%c0_11, %c0_12], %17 {strides = array<i32>} : memref<8x128xf32, #tpu.memory_space<vmem>>, vector<8x128xf32>,
    %c0_i32_13 = arith.constant 0 : i32
    %20 = arith.cmpi eq, %arg1, %c0_i32_13 : i32
    %21 = arith.extui %20 : i1 to i32
    %c0_i32_14 = arith.constant 0 : i32
    %22 = arith.cmpi ne, %21, %c0_i32_14 : i32
    scf.if %22 {
      %cst = arith.constant dense<0.000000e+00> : vector<8xf32>
      %23 = vector.multi_reduction <add>, %15, %cst [1] : vector<8x128xf32> to vector<8xf32>
      %24 = vector.shape_cast %23 : vector<8xf32> to vector<8x1xf32>
      %c0_15 = arith.constant 0 : index
      %c0_16 = arith.constant 0 : index
      %25 = vector.load %arg4[%c0_15, %c0_16] : memref<8x1xf32, #tpu.memory_space<vmem>>, vector<8x1xf32>
      tpu.vector_store %arg4[%c0_15, %c0_16], %24 {strides = array<i32>} : memref<8x1xf32, #tpu.memory_space<vmem>>, vector<8x1xf32>,
      %cst_17 = arith.constant dense<0.000000e+00> : vector<8xf32>
      %26 = vector.multi_reduction <add>, %17, %cst_17 [1] : vector<8x128xf32> to vector<8xf32>
      %27 = vector.shape_cast %26 : vector<8xf32> to vector<8x1xf32>
      %c0_18 = arith.constant 0 : index
      %c0_19 = arith.constant 0 : index
      %28 = vector.load %arg5[%c0_18, %c0_19] : memref<8x1xf32, #tpu.memory_space<vmem>>, vector<8x1xf32>
      tpu.vector_store %arg5[%c0_18, %c0_19], %27 {strides = array<i32>} : memref<8x1xf32, #tpu.memory_space<vmem>>, vector<8x1xf32>,
    } else {
    }
    return
  }
  func.func @transform_0(%arg0: i32, %arg1: i32) -> (i32, i32) {
    %c0_i32 = arith.constant 0 : i32
    %c0_i32_0 = arith.constant 0 : i32
    return %arg0, %c0_i32 : i32, i32
  }
  func.func @transform_1(%arg0: i32, %arg1: i32) -> (i32, i32) {
    %c0_i32 = arith.constant 0 : i32
    return %arg0, %arg1 : i32, i32
  }
  func.func @transform_2(%arg0: i32, %arg1: i32) -> (i32, i32) {
    %c0_i32 = arith.constant 0 : i32
    %c0_i32_0 = arith.constant 0 : i32
    return %arg0, %c0_i32 : i32, i32
  }
  func.func @transform_3(%arg0: i32, %arg1: i32) -> (i32, i32) {
    %c0_i32 = arith.constant 0 : i32
    %c0_i32_0 = arith.constant 0 : i32
    return %arg0, %c0_i32 : i32, i32
  }
}

module attributes {stable_mosaic.version = 11 : i64} {
  func.func @_znorm_kernel(%arg0: i32, %arg1: i32, %arg2: memref<8x128xf32, #tpu.memory_space<vmem>>, %arg3: memref<8x1xf32, #tpu.memory_space<vmem>>, %arg4: memref<8x1xf32, #tpu.memory_space<vmem>>, %arg5: memref<8x128xf32, #tpu.memory_space<vmem>>) attributes {dimension_semantics = [#tpu.dimension_semantics<parallel>, #tpu.dimension_semantics<parallel>], iteration_bounds = array<i64: 1, 2>, scalar_prefetch = 0 : i64, scratch_operands = 0 : i64, tpu.core_type = #tpu.core_type<tc>, window_params = [{transform_indices = @transform_0, window_bounds = array<i64: 8, 128>}, {transform_indices = @transform_1, window_bounds = array<i64: 8, 1>}, {transform_indices = @transform_2, window_bounds = array<i64: 8, 1>}, {transform_indices = @transform_3, window_bounds = array<i64: 8, 128>}]} {
    %c0 = arith.constant 0 : index
    %c0_0 = arith.constant 0 : index
    %0 = vector.load %arg2[%c0, %c0_0] : memref<8x128xf32, #tpu.memory_space<vmem>>, vector<8x128xf32>
    %c0_1 = arith.constant 0 : index
    %c0_2 = arith.constant 0 : index
    %1 = vector.load %arg3[%c0_1, %c0_2] : memref<8x1xf32, #tpu.memory_space<vmem>>, vector<8x1xf32>
    %2 = vector.broadcast %1 : vector<8x1xf32> to vector<8x128xf32>
    %3 = arith.subf %0, %2 : vector<8x128xf32>
    %c0_3 = arith.constant 0 : index
    %c0_4 = arith.constant 0 : index
    %4 = vector.load %arg4[%c0_3, %c0_4] : memref<8x1xf32, #tpu.memory_space<vmem>>, vector<8x1xf32>
    %5 = vector.broadcast %4 : vector<8x1xf32> to vector<8x128xf32>
    %6 = arith.mulf %3, %5 : vector<8x128xf32>
    %c0_5 = arith.constant 0 : index
    %c0_6 = arith.constant 0 : index
    %7 = vector.load %arg5[%c0_5, %c0_6] : memref<8x128xf32, #tpu.memory_space<vmem>>, vector<8x128xf32>
    tpu.vector_store %arg5[%c0_5, %c0_6], %6 {strides = array<i32>} : memref<8x128xf32, #tpu.memory_space<vmem>>, vector<8x128xf32>,
    return
  }
  func.func @transform_0(%arg0: i32, %arg1: i32) -> (i32, i32) {
    %c0_i32 = arith.constant 0 : i32
    return %arg0, %arg1 : i32, i32
  }
  func.func @transform_1(%arg0: i32, %arg1: i32) -> (i32, i32) {
    %c0_i32 = arith.constant 0 : i32
    %c0_i32_0 = arith.constant 0 : i32
    return %arg0, %c0_i32 : i32, i32
  }
  func.func @transform_2(%arg0: i32, %arg1: i32) -> (i32, i32) {
    %c0_i32 = arith.constant 0 : i32
    %c0_i32_0 = arith.constant 0 : i32
    return %arg0, %c0_i32 : i32, i32
  }
  func.func @transform_3(%arg0: i32, %arg1: i32) -> (i32, i32) {
    %c0_i32 = arith.constant 0 : i32
    return %arg0, %arg1 : i32, i32
  }
}

</mosaic_0001>

<llo_original>
// kernel: squeeze.3
$region0: #{squeeze.3}
  %s0 = inlined_call_operand.vmem [shape: f32[8], index: 0, kind: input, shape index: {}]
  %s1 = inlined_call_operand.vmem [shape: f32[2,4], index: 1, kind: output, shape index: {}]
  $region1: #{squeeze.3} parent=0
    #allocation0 [shape = 'u8[4096]{0}', space=vmem, size = 0x1000, scoped, tag = 'scoped mem for output reshape']
    #allocation1 [shape = 'u8[4096]{0}', space=vmem, size = 0x1000, scoped, tag = 'scoped mem for input reshape']
    %s3 = sshll.u32 1, 1
    %s4 = ssub.s32 %s3, 1
    %v5 = vld [vmem:[%s0] sm:%s4]
    %6 = vst [vmem:[#allocation1] sm:%s4] %v5
    %v7 = vld [vmem:[#allocation1] sm:$0x1]
    %vm8 = vcmask 31744
    %9 = vst.msk [vmem:[#allocation0] sm:$0x1] %vm8, %v7
    %v10 = vld [vmem:[#allocation1] sm:$0x1]
    %11 = vrot.lane.b32.xlu0 %v10, 124
    %v12 = vpop.permute.xlu0 %11
    %vm13 = vcmask 31744
    %s14 = scalar_lea.vmem [#allocation0], 1
    %15 = vst.msk [vmem:[%s14] sm:$0x1] %vm13, %v12
    %s17 = sshll.u32 1, 2
    %s18 = ssub.s32 %s17, 1
    %v20 = vld [vmem:[#allocation0] sm:%s18]
    %s21 = sshll.u32 1, 2
    %s22 = ssub.s32 %s21, 1
    %23 = vst [vmem:[%s1] sm:%s22] %v20

// kernel: _train_step.3
$region0: #{_train_step.3}
  #allocation0 [shape = 'u32[]', space=smem, size = 0x4, offset = 0x4, fixed_abs, tag = 'smem constant byte address 0x4 - core index']
  #allocation1 [shape = 'u32[144,128]{1,0:T(1,128)}', space=vmem, size = 0x12000, scoped, tag = 'internal scratch']
  %s0 = inlined_call_operand.vmem [shape: f32[8,256], index: 0, kind: input, shape index: {}]
  %s1 = inlined_call_operand.vmem [shape: f32[8,1], index: 1, kind: input, shape index: {}]
  %s2 = inlined_call_operand.vmem [shape: f32[8,1], index: 2, kind: input, shape index: {}]
  %s3 = inlined_call_operand.vmem [shape: f32[8,256], index: 3, kind: output, shape index: {}]
  %s4 = sld [smem:[#allocation0]]
  $region45: #{_train_step.3} parent=0
    _
  %s6 = ssub.s32 1, %s4
  %s7 = scalar_select 0, %s6, %s4
  loop: start=0, step=1, limit=4
  $region2: #{_train_step.3} parent=0 // loop_pre_header
    _
  $region3: #{_train_step.3} parent=0 // loop_header
    %s9 = sphi 0, %s13
    %p10 = scmp.ge.s32.totalorder %s9, 4
    %s16 = sphi 0, %s28
    %s17 = sphi 0, %s24
    %s18 = sphi 0, %s16
    %s19 = sphi 0, %s17
    %s20 = sphi 0, %s18
    %s21 = sphi 0, %s19
    %s33 = sphi 0, %s35
    %s36 = sphi 0, %s33
    %s37 = sphi 0, %s36
    %s53 = sphi 0, %s37
    %s59 = sphi 0, %s61
    %s62 = sphi 0, %s59
    %s63 = sphi 0, %s62
    %s79 = sphi 0, %s63
    %s85 = sphi 0, %s87
    %s88 = sphi 0, %s85
    %s89 = sphi 0, %s88
    %s105 = sphi 0, %s89
    %s113 = sphi 0, %s115
    %s116 = sphi 0, %s113
    %s117 = sphi 0, %s116
    %s133 = sphi 0, %s117
  $region4: #{_train_step.3} parent=0 // loop_header_branch
    %12 = sbr.rel (%p10) target = $region8
  $region5: #{_train_step.3} parent=0 // loop_body
    %s14 = ssub.s32 %s9, 1
    %s15 = ssub.s32 %s9, 2
    %s22 = sadd.s32 1, %s17
    %p23 = scmp.ge.s32.totalorder %s22, 2
    %s24 = scalar_select %p23, 0, %s22
    %s25 = sadd.s32 1, %s16
    %s26 = scalar_select %p23, %s25, %s16
    %p27 = scmp.ge.s32.totalorder %s26, 1
    %s28 = scalar_select %p27, 0, %s26
    %s29 = ssub.s32 %s16, %s28
    %s30 = ssub.s32 %s17, %s24
    %s31 = sor.u32 %s29, %s30
    %p32 = scmp.eq.s32.totalorder %s31, 0
    %s34 = sadd.s32 %s33, 1
    %s35 = scalar_select %p32, %s33, %s34
    %p38 = pneg %p32
    %p39 = scmp.eq.s32.totalorder %s9, 1
    %p40 = por %p38, %p39
    %p41 = scmp.ne.s32.totalorder %s33, %s36
    %p42 = scmp.eq.s32.totalorder %s9, 0
    %p43 = por %p41, %p42
    %p44 = scmp.ne.s32.totalorder %s33, %s36
    %p45 = scmp.eq.s32.totalorder %s14, 1
    %p46 = por %p44, %p45
    %p47 = scmp.ne.s32.totalorder %s36, %s37
    %p48 = scmp.eq.s32.totalorder %s14, 0
    %p49 = por %p47, %p48
    %p50 = scmp.ne.s32.totalorder %s36, %s37
    %p51 = scmp.eq.s32.totalorder %s15, 1
    %p52 = por %p50, %p51
    %p54 = scmp.ne.s32.totalorder %s37, %s53
    %p55 = scmp.eq.s32.totalorder %s15, 0
    %p56 = por %p54, %p55
    %s57 = ssub.s32 %s16, %s28
    %p58 = scmp.eq.s32.totalorder %s57, 0
    %s60 = sadd.s32 %s59, 1
    %s61 = scalar_select %p58, %s59, %s60
    %p64 = pneg %p58
    %p65 = scmp.eq.s32.totalorder %s9, 1
    %p66 = por %p64, %p65
    %p67 = scmp.ne.s32.totalorder %s59, %s62
    %p68 = scmp.eq.s32.totalorder %s9, 0
    %p69 = por %p67, %p68
    %p70 = scmp.ne.s32.totalorder %s59, %s62
    %p71 = scmp.eq.s32.totalorder %s14, 1
    %p72 = por %p70, %p71
    %p73 = scmp.ne.s32.totalorder %s62, %s63
    %p74 = scmp.eq.s32.totalorder %s14, 0
    %p75 = por %p73, %p74
    %p76 = scmp.ne.s32.totalorder %s62, %s63
    %p77 = scmp.eq.s32.totalorder %s15, 1
    %p78 = por %p76, %p77
    %p80 = scmp.ne.s32.totalorder %s63, %s79
    %p81 = scmp.eq.s32.totalorder %s15, 0
    %p82 = por %p80, %p81
    %s83 = ssub.s32 %s16, %s28
    %p84 = scmp.eq.s32.totalorder %s83, 0
    %s86 = sadd.s32 %s85, 1
    %s87 = scalar_select %p84, %s85, %s86
    %p90 = pneg %p84
    %p91 = scmp.eq.s32.totalorder %s9, 1
    %p92 = por %p90, %p91
    %p93 = scmp.ne.s32.totalorder %s85, %s88
    %p94 = scmp.eq.s32.totalorder %s9, 0
    %p95 = por %p93, %p94
    %p96 = scmp.ne.s32.totalorder %s85, %s88
    %p97 = scmp.eq.s32.totalorder %s14, 1
    %p98 = por %p96, %p97
    %p99 = scmp.ne.s32.totalorder %s88, %s89
    %p100 = scmp.eq.s32.totalorder %s14, 0
    %p101 = por %p99, %p100
    %p102 = scmp.ne.s32.totalorder %s88, %s89
    %p103 = scmp.eq.s32.totalorder %s15, 1
    %p104 = por %p102, %p103
    %p106 = scmp.ne.s32.totalorder %s89, %s105
    %p107 = scmp.eq.s32.totalorder %s15, 0
    %p108 = por %p106, %p107
    %s109 = ssub.s32 %s16, %s28
    %s110 = ssub.s32 %s17, %s24
    %s111 = sor.u32 %s109, %s110
    %p112 = scmp.eq.s32.totalorder %s111, 0
    %s114 = sadd.s32 %s113, 1
    %s115 = scalar_select %p112, %s113, %s114
    %p118 = pneg %p112
    %p119 = scmp.eq.s32.totalorder %s9, 1
    %p120 = por %p118, %p119
    %p121 = scmp.ne.s32.totalorder %s113, %s116
    %p122 = scmp.eq.s32.totalorder %s9, 0
    %p123 = por %p121, %p122
    %p124 = scmp.ne.s32.totalorder %s113, %s116
    %p125 = scmp.eq.s32.totalorder %s14, 1
    %p126 = por %p124, %p125
    %p127 = scmp.ne.s32.totalorder %s116, %s117
    %p128 = scmp.eq.s32.totalorder %s14, 0
    %p129 = por %p127, %p128
    %p130 = scmp.ne.s32.totalorder %s116, %s117
    %p131 = scmp.eq.s32.totalorder %s15, 1
    %p132 = por %p130, %p131
    %p134 = scmp.ne.s32.totalorder %s117, %s133
    %p135 = scmp.eq.s32.totalorder %s15, 0
    %p136 = por %p134, %p135
    %p137 = scmp.le.s32.totalorder 1, %s9
    %p138 = scmp.lt.s32.totalorder %s9, 3
    %p139 = pnand %p137, %p138
    %p140 = pneg %p139
    // Predicated region
    $region9: #{_train_step.3} parent=5 // pred_check
      _
    $region10: #{_train_step.3} parent=5 // pred_check_branch
      %142 = sbr.rel (%p139) target = $region12
    $region11: #{_train_step.3} parent=5 // pred_region
      %s143 = ssub.s32 %s9, 1
      // Predicated region
      $region13: #{_train_step.3} parent=11 // pred_check
        %p144 = pneg %p75
      $region14: #{_train_step.3} parent=11 // pred_check_branch
        %146 = sbr.rel (%p144) target = $region16
      $region15: #{_train_step.3} parent=11 // pred_region
        %p147 = scmp.lt.s32.totalorder %s18, 0
        %s148 = scalar_select %p147, %s18, 0
        %s149 = smul.addr %s148, 8
        %s150 = scalar_lea.vmem %s1, %s149
      $region16: #{_train_step.3} parent=11 // pred_fallthru
        _
      // Predicated region
      $region17: #{_train_step.3} parent=11 // pred_check
        %p151 = pneg %p101
      $region18: #{_train_step.3} parent=11 // pred_check_branch
        %153 = sbr.rel (%p151) target = $region20
      $region19: #{_train_step.3} parent=11 // pred_region
        %p154 = scmp.lt.s32.totalorder %s18, 0
        %s155 = scalar_select %p154, %s18, 0
        %s156 = smul.addr %s155, 8
        %s157 = scalar_lea.vmem %s2, %s156
      $region20: #{_train_step.3} parent=11 // pred_fallthru
        _
    $region12: #{_train_step.3} parent=5 // pred_fallthru
      _
    %p158 = scmp.lt.s32.totalorder %s9, 2
    // Predicated region
    $region21: #{_train_step.3} parent=5 // pred_check
      %p159 = pneg %p158
    $region22: #{_train_step.3} parent=5 // pred_check_branch
      %161 = sbr.rel (%p159) target = $region24
    $region23: #{_train_step.3} parent=5 // pred_region
      // Predicated region
      $region25: #{_train_step.3} parent=23 // pred_check
        %p162 = pneg %p43
      $region26: #{_train_step.3} parent=23 // pred_check_branch
        %164 = sbr.rel (%p162) target = $region28
      $region27: #{_train_step.3} parent=23 // pred_region
        %p165 = scmp.lt.s32.totalorder %s16, 0
        %s166 = scalar_select %p165, %s16, 0
        %p167 = scmp.lt.s32.totalorder %s17, 1
        %s168 = scalar_select %p167, %s17, 1
        %s169 = smul.addr %s166, 2
        %s170 = sadd.s32 %s168, %s169
        %s171 = smul.addr %s170, 8
        %s172 = scalar_lea.vmem %s0, %s171
      $region28: #{_train_step.3} parent=23 // pred_fallthru
        _
    $region24: #{_train_step.3} parent=5 // pred_fallthru
      _
    %p173 = scmp.le.s32.totalorder 1, %s9
    %p174 = scmp.lt.s32.totalorder %s9, 3
    %p175 = pnand %p173, %p174
    %p176 = pneg %p175
    // Predicated region
    $region29: #{_train_step.3} parent=5 // pred_check
      _
    $region30: #{_train_step.3} parent=5 // pred_check_branch
      %178 = sbr.rel (%p175) target = $region32
    $region31: #{_train_step.3} parent=5 // pred_region
      %s179 = ssub.s32 %s9, 1
      %p180 = scmp.lt.s32.totalorder %s18, 0
      %s181 = scalar_select %p180, %s18, 0
      %p182 = scmp.lt.s32.totalorder %s19, 1
      %s183 = scalar_select %p182, %s19, 1
      %s184 = smul.addr %s181, 2
      %s185 = sadd.s32 %s183, %s184
      %s186 = smul.addr %s185, 8
      %s187 = scalar_lea.vmem %s0, %s186
      %p188 = pneg %p49
      %p189 = pneg %p46
      %p190 = scmp.lt.s32.totalorder %s18, 0
      %s191 = scalar_select %p190, %s18, 0
      %s192 = smul.addr %s191, 8
      %s193 = scalar_lea.vmem %s1, %s192
      %p194 = pneg %p75
      %p195 = pneg %p72
      %p196 = scmp.lt.s32.totalorder %s18, 0
      %s197 = scalar_select %p196, %s18, 0
      %s198 = smul.addr %s197, 8
      %s199 = scalar_lea.vmem %s2, %s198
      %p200 = pneg %p101
      %p201 = pneg %p98
      %p202 = pneg %p129
      %p203 = pneg %p126
      %p204 = scmp.lt.s32.totalorder %s18, 0
      %s205 = scalar_select %p204, %s18, 0
      %p206 = scmp.lt.s32.totalorder %s19, 1
      %s207 = scalar_select %p206, %s19, 1
      %s208 = smul.addr %s205, 2
      %s209 = sadd.s32 %s207, %s208
      %s210 = smul.addr %s209, 8
      %s211 = scalar_lea.vmem %s3, %s210
      %p212 = scmp.lt.s32.totalorder %s18, 0
      %s213 = scalar_select %p212, %s18, 0
      %p214 = scmp.lt.s32.totalorder %s19, 1
      %s215 = scalar_select %p214, %s19, 1
      %s216 = smul.addr %s213, 2
      %s217 = sadd.s32 %s215, %s216
      %s218 = smul.addr %s217, 8
      %s219 = scalar_lea.vmem %s0, %s218
      %p220 = scmp.lt.s32.totalorder %s18, 0
      %s221 = scalar_select %p220, %s18, 0
      %s222 = smul.addr %s221, 8
      %s223 = scalar_lea.vmem %s1, %s222
      %p224 = scmp.lt.s32.totalorder %s18, 0
      %s225 = scalar_select %p224, %s18, 0
      %s226 = smul.addr %s225, 8
      %s227 = scalar_lea.vmem %s2, %s226
      %p228 = scmp.lt.s32.totalorder %s18, 0
      %s229 = scalar_select %p228, %s18, 0
      %p230 = scmp.lt.s32.totalorder %s19, 1
      %s231 = scalar_select %p230, %s19, 1
      %s232 = smul.addr %s229, 2
      %s233 = sadd.s32 %s231, %s232
      %s234 = smul.addr %s233, 8
      %s235 = scalar_lea.vmem %s3, %s234
      %v236 = vld [vmem:[%s219] sm:$0xff]
      %v237 = vld [vmem:[%s223] sm:$0xff]
      %239 = vset.pattern.permute.xlu0 0
      %240 = vperm.xlu0 %239, %v237
      %v241 = vpop.permute.xlu0 %240
      %v243 = vsub.f32 %v236, %v241
      %v244 = vld [vmem:[%s227] sm:$0xff]
      %246 = vset.pattern.permute.xlu0 0
      %247 = vperm.xlu0 %246, %v244
      %v248 = vpop.permute.xlu0 %247
      %v250 = vmul.f32 %v243, %v248
      %251 = vst [vmem:[%s235] sm:$0xff] %v250
      %p252 = scmp.lt.s32.totalorder %s18, 0
      %s253 = scalar_select %p252, %s18, 0
      %p254 = scmp.lt.s32.totalorder %s19, 1
      %s255 = scalar_select %p254, %s19, 1
      %s256 = smul.addr %s253, 2
      %s257 = sadd.s32 %s255, %s256
      %s258 = smul.addr %s257, 8
      %s259 = scalar_lea.vmem %s3, %s258
      // Predicated region
      $region33: #{_train_step.3} parent=31 // pred_check
        %p260 = pneg %p126
      $region34: #{_train_step.3} parent=31 // pred_check_branch
        %262 = sbr.rel (%p260) target = $region36
      $region35: #{_train_step.3} parent=31 // pred_region
        _
      $region36: #{_train_step.3} parent=31 // pred_fallthru
        _
    $region32: #{_train_step.3} parent=5 // pred_fallthru
      _
    %p263 = scmp.le.s32.totalorder 2, %s9
    // Predicated region
    $region37: #{_train_step.3} parent=5 // pred_check
      %p264 = pneg %p263
    $region38: #{_train_step.3} parent=5 // pred_check_branch
      %266 = sbr.rel (%p264) target = $region40
    $region39: #{_train_step.3} parent=5 // pred_region
      %s267 = ssub.s32 %s9, 2
      // Predicated region
      $region41: #{_train_step.3} parent=39 // pred_check
        %p268 = pneg %p132
      $region42: #{_train_step.3} parent=39 // pred_check_branch
        %270 = sbr.rel (%p268) target = $region44
      $region43: #{_train_step.3} parent=39 // pred_region
        %p271 = scmp.lt.s32.totalorder %s20, 0
        %s272 = scalar_select %p271, %s20, 0
        %p273 = scmp.lt.s32.totalorder %s21, 1
        %s274 = scalar_select %p273, %s21, 1
        %s275 = smul.addr %s272, 2
        %s276 = sadd.s32 %s274, %s275
        %s277 = smul.addr %s276, 8
        %s278 = scalar_lea.vmem %s3, %s277
      $region44: #{_train_step.3} parent=39 // pred_fallthru
        _
    $region40: #{_train_step.3} parent=5 // pred_fallthru
      _
  $region6: #{_train_step.3} parent=0 // loop_footer
    %s13 = sadd.s32 1, %s9
  $region7: #{_train_step.3} parent=0 // loop_footer_branch
    %8 = sbr.rel target = $region3
  $region8: #{_train_step.3} parent=0 // loop_exit
    _

// kernel: _train_step.2
$region0: #{_train_step.2}
  #allocation0 [shape = 'u32[]', space=smem, size = 0x4, offset = 0x4, fixed_abs, tag = 'smem constant byte address 0x4 - core index']
  #allocation1 [shape = 'u32[144,128]{1,0:T(1,128)}', space=vmem, size = 0x12000, scoped, tag = 'internal scratch']
  #allocation2 [shape = 'f32[8,128]{1,0:T(8,128)}', space=vmem, size = 0x1000, scoped, tag = 'scratch operand']
  #allocation3 [shape = 'f32[8,128]{1,0:T(8,128)}', space=vmem, size = 0x1000, scoped, tag = 'scratch operand']
  %s0 = inlined_call_operand.vmem [shape: f32[8,1], index: 0, kind: input, shape index: {}]
  %s1 = inlined_call_operand.vmem [shape: f32[8,256], index: 1, kind: input, shape index: {}]
  %s2 = inlined_call_operand.vmem [shape: f32[8,1], index: 2, kind: output, shape index: {0}]
  %s3 = inlined_call_operand.vmem [shape: f32[8,1], index: 3, kind: output, shape index: {1}]
  %4 = xla_tuple %s2, %s3
  %s5 = sld [smem:[#allocation0]]
  $region34: #{_train_step.2} parent=0
    _
  %s7 = ssub.s32 1, %s5
  %s8 = scalar_select 0, %s7, %s5
  // Predicated region
  $region2: #{_train_step.2} parent=0 // pred_check
    _
  $region3: #{_train_step.2} parent=0 // pred_check_branch
    %10 = sbr.rel (0) target = $region5
  $region4: #{_train_step.2} parent=0 // pred_region
    _
  $region5: #{_train_step.2} parent=0 // pred_fallthru
    _
  // Predicated region
  $region6: #{_train_step.2} parent=0 // pred_check
    _
  $region7: #{_train_step.2} parent=0 // pred_check_branch
    %12 = sbr.rel (0) target = $region9
  $region8: #{_train_step.2} parent=0 // pred_region
    _
  $region9: #{_train_step.2} parent=0 // pred_fallthru
    _
  %p13 = scmp.eq.s32.totalorder 0, 0
  // Predicated region
  $region10: #{_train_step.2} parent=0 // pred_check
    %p14 = pneg %p13
  $region11: #{_train_step.2} parent=0 // pred_check_branch
    %16 = sbr.rel (%p14) target = $region13
  $region12: #{_train_step.2} parent=0 // pred_region
    %17 = vst [vmem:[#allocation2] sm:$0xff] 0.0
    %18 = vst [vmem:[#allocation3] sm:$0xff] 0.0
  $region13: #{_train_step.2} parent=0 // pred_fallthru
    _
  %v19 = vld [vmem:[%s0] sm:$0xff]
  %v20 = vld [vmem:[#allocation2] sm:$0xff]
  %v21 = vld [vmem:[#allocation3] sm:$0xff]
  %v22 = vld [vmem:[%s1] sm:$0xff]
  %24 = vset.pattern.permute.xlu0 0
  %25 = vperm.xlu0 %24, %v19
  %v26 = vpop.permute.xlu0 %25
  %v28 = vsub.f32 %v22, %v26
  %v29 = vadd.f32 %v20, %v28
  %v30 = vmul.f32 %v28, %v28
  %v31 = vadd.f32 %v21, %v30
  %v32 = vld [vmem:[%s1 + $0x8] sm:$0xff]
  %v33 = vsub.f32 %v32, %v26
  %v34 = vadd.f32 %v29, %v33
  %v35 = vmul.f32 %v33, %v33
  %v36 = vadd.f32 %v31, %v35
  %37 = vst [vmem:[#allocation2] sm:$0xff] %v34
  %38 = vst [vmem:[#allocation3] sm:$0xff] %v36
  // Predicated region
  $region14: #{_train_step.2} parent=0 // pred_check
    %p39 = pneg %p13
  $region15: #{_train_step.2} parent=0 // pred_check_branch
    %41 = sbr.rel (%p39) target = $region17
  $region16: #{_train_step.2} parent=0 // pred_region
    %42 = vadd.xlane.f32.xlu0 %v34
    %v43 = vpop.xlane.xlu0 %42
    %vm44 = vcmask 7168
    %45 = vst.msk [vmem:[%s2] sm:$0xff] %vm44, %v43
    %46 = vadd.xlane.f32.xlu0 %v36
    %v47 = vpop.xlane.xlu0 %46
    %48 = vst.msk [vmem:[%s3] sm:$0xff] %vm44, %v47
  $region17: #{_train_step.2} parent=0 // pred_fallthru
    _
  // Predicated region
  $region18: #{_train_step.2} parent=0 // pred_check
    _
  $region19: #{_train_step.2} parent=0 // pred_check_branch
    %50 = sbr.rel (0) target = $region21
  $region20: #{_train_step.2} parent=0 // pred_region
    _
  $region21: #{_train_step.2} parent=0 // pred_fallthru
    _
  // Predicated region
  $region22: #{_train_step.2} parent=0 // pred_check
    _
  $region23: #{_train_step.2} parent=0 // pred_check_branch
    %52 = sbr.rel (0) target = $region25
  $region24: #{_train_step.2} parent=0 // pred_region
    _
  $region25: #{_train_step.2} parent=0 // pred_fallthru
    _
  // Predicated region
  $region26: #{_train_step.2} parent=0 // pred_check
    _
  $region27: #{_train_step.2} parent=0 // pred_check_branch
    %54 = sbr.rel (0) target = $region29
  $region28: #{_train_step.2} parent=0 // pred_region
    _
  $region29: #{_train_step.2} parent=0 // pred_fallthru
    _
  // Predicated region
  $region30: #{_train_step.2} parent=0 // pred_check
    _
  $region31: #{_train_step.2} parent=0 // pred_check_branch
    %56 = sbr.rel (0) target = $region33
  $region32: #{_train_step.2} parent=0 // pred_region
    _
  $region33: #{_train_step.2} parent=0 // pred_fallthru
    _

</llo_original>
